<compile_context>
chip_gen: v5e
topology: v5e:2x2
jax: 0.10.0
libtpu: 0.0.40
codegen_flags: <defaults>
</compile_context>

<pallas_src>
import functools

import jax
import jax.numpy as jnp
from jax.experimental import pallas as pl
from jax.experimental.pallas import tpu as pltpu

EPS = 1e-5  # PyTorch BatchNorm1d default


# --------------------------------------------------------------------------- #
# Kernel: 4 dots + 3 ReLUs, biases read from a single packed slab.
# --------------------------------------------------------------------------- #
def decoder_kernel(z_ref, w1_ref, w2_ref, w3_ref, w4_ref, bias_ref, out_ref):
    b1 = bias_ref[0:1, :]
    b2 = bias_ref[1:2, :]
    b3 = bias_ref[2:3, :]
    b4 = bias_ref[3:4, :]

    h = jnp.dot(z_ref[...], w1_ref[...], preferred_element_type=jnp.float32) + b1
    h = jnp.maximum(h, 0.0)

    h = jnp.dot(h, w2_ref[...], preferred_element_type=jnp.float32) + b2
    h = jnp.maximum(h, 0.0)

    h = jnp.dot(h, w3_ref[...], preferred_element_type=jnp.float32) + b3
    h = jnp.maximum(h, 0.0)

    out_ref[...] = (
        jnp.dot(h, w4_ref[...], preferred_element_type=jnp.float32) + b4
    ).astype(out_ref.dtype)


# --------------------------------------------------------------------------- #
# Parameter prep: fold BN into linears, pad everything to lane-dense tiles.
# --------------------------------------------------------------------------- #
def _fold_bn(w, b, gamma, beta, rm, rv):
    s = gamma * jax.lax.rsqrt(rv + EPS)
    return w * s[None, :], (b - rm) * s + beta


def _pad2(a, rows, cols):
    return jnp.pad(a, ((0, rows - a.shape[0]), (0, cols - a.shape[1])))


def _round_up(x, m):
    return ((x + m - 1) // m) * m


def decoder_forward(z, params, *, max_tile_b=256):
    """z: [B, latent_dim] float32; params: flat tuple of raw (unfolded) arrays."""
    (w1, b1, g1, be1, rm1, rv1,
     w2, b2, g2, be2, rm2, rv2,
     w3, b3, g3, be3, rm3, rv3,
     w4, b4) = params

    B, latent = z.shape
    hidden = w1.shape[1]
    out_dim = w4.shape[1]

    # One padded feature width for every layer -> lane-dense loads/stores.
    F = _round_up(max(latent, hidden, out_dim, 128), 128)

    # Fold BatchNorm into the linear layers (one-time transform).
    w1f, b1f = _fold_bn(w1, b1, g1, be1, rm1, rv1)
    w2f, b2f = _fold_bn(w2, b2, g2, be2, rm2, rv2)
    w3f, b3f = _fold_bn(w3, b3, g3, be3, rm3, rv3)

    W1 = _pad2(w1f, F, F)
    W2 = _pad2(w2f, F, F)
    W3 = _pad2(w3f, F, F)
    W4 = _pad2(w4, F, F)

    # Pack the four biases into a single (8, F) slab (one DMA, one vreg tile).
    bias_slab = jnp.zeros((8, F), jnp.float32)
    bias_slab = bias_slab.at[0, :hidden].set(b1f)
    bias_slab = bias_slab.at[1, :hidden].set(b2f)
    bias_slab = bias_slab.at[2, :hidden].set(b3f)
    bias_slab = bias_slab.at[3, :out_dim].set(b4)

    # Batch tiling: multiple of 8 sublanes; single step at small B.
    tile_b = min(max_tile_b, _round_up(B, 8))
    b_pad = _round_up(B, tile_b)
    z_pad = jnp.pad(z.astype(jnp.float32), ((0, b_pad - B), (0, F - latent)))

    grid = (b_pad // tile_b,)
    act_spec = pl.BlockSpec((tile_b, F), lambda i: (i, 0))
    w_spec = pl.BlockSpec((F, F), lambda i: (0, 0))       # VMEM-resident weights
    bias_spec = pl.BlockSpec((8, F), lambda i: (0, 0))

    out_pad = pl.pallas_call(
        decoder_kernel,
        out_shape=jax.ShapeDtypeStruct((b_pad, F), jnp.float32),
        grid=grid,
        in_specs=[act_spec, w_spec, w_spec, w_spec, w_spec, bias_spec],
        out_specs=act_spec,
        compiler_params=pltpu.CompilerParams(
            dimension_semantics=("parallel",)),
    )(z_pad, W1, W2, W3, W4, bias_slab)

    return out_pad[:B, :out_dim]


# --------------------------------------------------------------------------- #
# Synthetic parameters (shapes match the PyTorch module) + pure-JAX reference.
# --------------------------------------------------------------------------- #
def make_params(key, latent_dim, hidden_dim, out_dim):
    keys = jax.random.split(key, 20)
    k = iter(keys)

    def lin(d_in, d_out):
        w = jax.random.normal(next(k), (d_in, d_out), jnp.float32) * 0.1
        b = jax.random.normal(next(k), (d_out,), jnp.float32) * 0.1
        return w, b

    def bn(d):
        gamma = 1.0 + 0.1 * jax.random.normal(next(k), (d,), jnp.float32)
        beta = 0.1 * jax.random.normal(next(k), (d,), jnp.float32)
        rmean = 0.1 * jax.random.normal(next(k), (d,), jnp.float32)
        rvar = jax.random.uniform(next(k), (d,), jnp.float32,
                                  minval=0.5, maxval=1.5)
        return gamma, beta, rmean, rvar

    w1, b1 = lin(latent_dim, hidden_dim)
    g1, be1, rm1, rv1 = bn(hidden_dim)
    w2, b2 = lin(hidden_dim, hidden_dim)
    g2, be2, rm2, rv2 = bn(hidden_dim)
    w3, b3 = lin(hidden_dim, hidden_dim)
    g3, be3, rm3, rv3 = bn(hidden_dim)
    w4, b4 = lin(hidden_dim, out_dim)

    return (w1, b1, g1, be1, rm1, rv1,
            w2, b2, g2, be2, rm2, rv2,
            w3, b3, g3, be3, rm3, rv3,
            w4, b4)


def decoder_reference(z, params):
    """Pure-JAX reference of the same inference-mode forward (unfolded BN)."""
    (w1, b1, g1, be1, rm1, rv1,
     w2, b2, g2, be2, rm2, rv2,
     w3, b3, g3, be3, rm3, rv3,
     w4, b4) = params

    def bn_relu(h, g, be, rm, rv):
        return jnp.maximum((h - rm) * jax.lax.rsqrt(rv + EPS) * g + be, 0.0)

    h = bn_relu(z @ w1 + b1, g1, be1, rm1, rv1)
    h = bn_relu(h @ w2 + b2, g2, be2, rm2, rv2)
    h = bn_relu(h @ w3 + b3, g3, be3, rm3, rv3)
    return h @ w4 + b4


if __name__ == "__main__":
    # cfg: latent_dim=16, decoder_hidden_dim=32, dim=8, batch_norm=True, dropout_rate=0.1
    B, LATENT, HIDDEN, DIM = 8, 16, 32, 8

    key = jax.random.PRNGKey(0)
    k_z, k_p = jax.random.split(key)
    z = jax.random.normal(k_z, (B, LATENT), jnp.float32)
    params = make_params(k_p, LATENT, HIDDEN, DIM)

    out = jax.block_until_ready(decoder_forward(z, params))

    ref = decoder_reference(z, params)
    assert out.shape == (B, DIM), out.shape
    # BN folding reassociates the BN affine with the matmul; tolerance covers it.
    assert jnp.allclose(out, ref, atol=1e-4, rtol=1e-4), "mismatch vs reference"

    print("KERNEL_OK")
</pallas_src>

<mosaic_0001>
module attributes {stable_mosaic.version = 11 : i64} {
  func.func @decoder_kernel(%arg0: i32, %arg1: memref<8x128xf32, #tpu.memory_space<vmem>>, %arg2: memref<128x128xf32, #tpu.memory_space<vmem>>, %arg3: memref<128x128xf32, #tpu.memory_space<vmem>>, %arg4: memref<128x128xf32, #tpu.memory_space<vmem>>, %arg5: memref<128x128xf32, #tpu.memory_space<vmem>>, %arg6: memref<8x128xf32, #tpu.memory_space<vmem>>, %arg7: memref<8x128xf32, #tpu.memory_space<vmem>>) attributes {dimension_semantics = [#tpu.dimension_semantics<parallel>], iteration_bounds = array<i64: 1>, scalar_prefetch = 0 : i64, scratch_operands = 0 : i64, tpu.core_type = #tpu.core_type<tc>, window_params = [{transform_indices = @transform_0, window_bounds = array<i64: 8, 128>}, {pipeline_mode = #tpu.pipeline_mode<synchronous>, transform_indices = @transform_1, window_bounds = array<i64: 128, 128>}, {pipeline_mode = #tpu.pipeline_mode<synchronous>, transform_indices = @transform_2, window_bounds = array<i64: 128, 128>}, {pipeline_mode = #tpu.pipeline_mode<synchronous>, transform_indices = @transform_3, window_bounds = array<i64: 128, 128>}, {pipeline_mode = #tpu.pipeline_mode<synchronous>, transform_indices = @transform_4, window_bounds = array<i64: 128, 128>}, {pipeline_mode = #tpu.pipeline_mode<synchronous>, transform_indices = @transform_5, window_bounds = array<i64: 8, 128>}, {transform_indices = @transform_6, window_bounds = array<i64: 8, 128>}]} {
    %c0 = arith.constant 0 : index
    %c0_0 = arith.constant 0 : index
    %0 = vector.load %arg6[%c0, %c0_0] : memref<8x128xf32, #tpu.memory_space<vmem>>, vector<1x128xf32>
    %c1 = arith.constant 1 : index
    %c0_1 = arith.constant 0 : index
    %1 = vector.load %arg6[%c1, %c0_1] : memref<8x128xf32, #tpu.memory_space<vmem>>, vector<1x128xf32>
    %c2 = arith.constant 2 : index
    %c0_2 = arith.constant 0 : index
    %2 = vector.load %arg6[%c2, %c0_2] : memref<8x128xf32, #tpu.memory_space<vmem>>, vector<1x128xf32>
    %c3 = arith.constant 3 : index
    %c0_3 = arith.constant 0 : index
    %3 = vector.load %arg6[%c3, %c0_3] : memref<8x128xf32, #tpu.memory_space<vmem>>, vector<1x128xf32>
    %c0_4 = arith.constant 0 : index
    %c0_5 = arith.constant 0 : index
    %4 = vector.load %arg1[%c0_4, %c0_5] : memref<8x128xf32, #tpu.memory_space<vmem>>, vector<8x128xf32>
    %c0_6 = arith.constant 0 : index
    %c0_7 = arith.constant 0 : index
    %5 = vector.load %arg2[%c0_6, %c0_7] : memref<128x128xf32, #tpu.memory_space<vmem>>, vector<128x128xf32>
    %cst = arith.constant dense<0.000000e+00> : vector<8x128xf32>
    %6 = tpu.matmul %4, %5, %cst {dimension_numbers = #tpu.dot_dimension_numbers<[1], [0], [0], [1], [0, 0, 1, 1], [], []>} : vector<8x128xf32>, vector<128x128xf32>, vector<8x128xf32> -> vector<8x128xf32>
    %7 = vector.broadcast %0 : vector<1x128xf32> to vector<8x128xf32>
    %8 = arith.addf %6, %7 : vector<8x128xf32>
    %cst_8 = arith.constant 0.000000e+00 : f32
    %9 = vector.broadcast %cst_8 : f32 to vector<8x128xf32>
    %10 = arith.maximumf %8, %9 : vector<8x128xf32>
    %c0_9 = arith.constant 0 : index
    %c0_10 = arith.constant 0 : index
    %11 = vector.load %arg3[%c0_9, %c0_10] : memref<128x128xf32, #tpu.memory_space<vmem>>, vector<128x128xf32>
    %cst_11 = arith.constant dense<0.000000e+00> : vector<8x128xf32>
    %12 = tpu.matmul %10, %11, %cst_11 {dimension_numbers = #tpu.dot_dimension_numbers<[1], [0], [0], [1], [0, 0, 1, 1], [], []>} : vector<8x128xf32>, vector<128x128xf32>, vector<8x128xf32> -> vector<8x128xf32>
    %13 = vector.broadcast %1 : vector<1x128xf32> to vector<8x128xf32>
    %14 = arith.addf %12, %13 : vector<8x128xf32>
    %cst_12 = arith.constant 0.000000e+00 : f32
    %15 = vector.broadcast %cst_12 : f32 to vector<8x128xf32>
    %16 = arith.maximumf %14, %15 : vector<8x128xf32>
    %c0_13 = arith.constant 0 : index
    %c0_14 = arith.constant 0 : index
    %17 = vector.load %arg4[%c0_13, %c0_14] : memref<128x128xf32, #tpu.memory_space<vmem>>, vector<128x128xf32>
    %cst_15 = arith.constant dense<0.000000e+00> : vector<8x128xf32>
    %18 = tpu.matmul %16, %17, %cst_15 {dimension_numbers = #tpu.dot_dimension_numbers<[1], [0], [0], [1], [0, 0, 1, 1], [], []>} : vector<8x128xf32>, vector<128x128xf32>, vector<8x128xf32> -> vector<8x128xf32>
    %19 = vector.broadcast %2 : vector<1x128xf32> to vector<8x128xf32>
    %20 = arith.addf %18, %19 : vector<8x128xf32>
    %cst_16 = arith.constant 0.000000e+00 : f32
    %21 = vector.broadcast %cst_16 : f32 to vector<8x128xf32>
    %22 = arith.maximumf %20, %21 : vector<8x128xf32>
    %c0_17 = arith.constant 0 : index
    %c0_18 = arith.constant 0 : index
    %23 = vector.load %arg5[%c0_17, %c0_18] : memref<128x128xf32, #tpu.memory_space<vmem>>, vector<128x128xf32>
    %cst_19 = arith.constant dense<0.000000e+00> : vector<8x128xf32>
    %24 = tpu.matmul %22, %23, %cst_19 {dimension_numbers = #tpu.dot_dimension_numbers<[1], [0], [0], [1], [0, 0, 1, 1], [], []>} : vector<8x128xf32>, vector<128x128xf32>, vector<8x128xf32> -> vector<8x128xf32>
    %25 = vector.broadcast %3 : vector<1x128xf32> to vector<8x128xf32>
    %26 = arith.addf %24, %25 : vector<8x128xf32>
    %c0_20 = arith.constant 0 : index
    %c0_21 = arith.constant 0 : index
    %27 = vector.load %arg7[%c0_20, %c0_21] : memref<8x128xf32, #tpu.memory_space<vmem>>, vector<8x128xf32>
    tpu.vector_store %arg7[%c0_20, %c0_21], %26 {strides = array<i32>} : memref<8x128xf32, #tpu.memory_space<vmem>>, vector<8x128xf32>,
    return
  }
  func.func @transform_0(%arg0: i32) -> (i32, i32) {
    %c0_i32 = arith.constant 0 : i32
    %c0_i32_0 = arith.constant 0 : i32
    return %arg0, %c0_i32 : i32, i32
  }
  func.func @transform_1(%arg0: i32) -> (i32, i32) {
    %c0_i32 = arith.constant 0 : i32
    %c0_i32_0 = arith.constant 0 : i32
    %c0_i32_1 = arith.constant 0 : i32
    return %c0_i32, %c0_i32_0 : i32, i32
  }
  func.func @transform_2(%arg0: i32) -> (i32, i32) {
    %c0_i32 = arith.constant 0 : i32
    %c0_i32_0 = arith.constant 0 : i32
    %c0_i32_1 = arith.constant 0 : i32
    return %c0_i32, %c0_i32_0 : i32, i32
  }
  func.func @transform_3(%arg0: i32) -> (i32, i32) {
    %c0_i32 = arith.constant 0 : i32
    %c0_i32_0 = arith.constant 0 : i32
    %c0_i32_1 = arith.constant 0 : i32
    return %c0_i32, %c0_i32_0 : i32, i32
  }
  func.func @transform_4(%arg0: i32) -> (i32, i32) {
    %c0_i32 = arith.constant 0 : i32
    %c0_i32_0 = arith.constant 0 : i32
    %c0_i32_1 = arith.constant 0 : i32
    return %c0_i32, %c0_i32_0 : i32, i32
  }
  func.func @transform_5(%arg0: i32) -> (i32, i32) {
    %c0_i32 = arith.constant 0 : i32
    %c0_i32_0 = arith.constant 0 : i32
    %c0_i32_1 = arith.constant 0 : i32
    return %c0_i32, %c0_i32_0 : i32, i32
  }
  func.func @transform_6(%arg0: i32) -> (i32, i32) {
    %c0_i32 = arith.constant 0 : i32
    %c0_i32_0 = arith.constant 0 : i32
    return %arg0, %c0_i32 : i32, i32
  }
}

</mosaic_0001>

<llo_original>
// kernel: tpu_custom_call.1
$region0: #{tpu_custom_call.1}
  #allocation0 [shape = 'u32[]', space=smem, size = 0x4, offset = 0x4, fixed_abs, tag = 'smem constant byte address 0x4 - core index']
  #allocation1 [shape = 'u32[72,128]{1,0:T(1,128)}', space=vmem, size = 0x9000, scoped, tag = 'internal scratch']
  %s0 = inlined_call_operand.hbm [shape: f32[8,128], index: 0, kind: input, shape index: {}]
  %s1 = inlined_call_operand.hbm [shape: f32[128,128], index: 1, kind: input, shape index: {}]
  %s2 = inlined_call_operand.hbm [shape: f32[128,128], index: 2, kind: input, shape index: {}]
  %s3 = inlined_call_operand.hbm [shape: f32[128,128], index: 3, kind: input, shape index: {}]
  %s4 = inlined_call_operand.hbm [shape: f32[128,128], index: 4, kind: input, shape index: {}]
  %s5 = inlined_call_operand.hbm [shape: f32[8,128], index: 5, kind: input, shape index: {}]
  %s6 = inlined_call_operand.hbm [shape: f32[8,128], index: 6, kind: output, shape index: {}]
  %s7 = sld [smem:[#allocation0]]
  $region58: #{tpu_custom_call.1} parent=0
    _
  %s9 = ssub.s32 1, %s7
  %s10 = scalar_select 0, %s9, %s7
  $region1: #{tpu_custom_call.1} parent=0
    #allocation2 [shape = 'u8[4096]{0}', space=vmem, size = 0x1000, scoped, tag = 'input window, operand 0, single buffered']
    #allocation3 [shape = 's32[1]{0}', space=sflag, size = 0x4, scoped, tag = 'scoped memory for tpu_custom_call.1']
    #allocation4 [shape = 's32[1]{0}', space=sflag, size = 0x4, scoped, tag = 'scoped memory for tpu_custom_call.1']
    #allocation5 [shape = 'u8[65536]{0}', space=vmem, size = 0x10000, scoped, tag = 'input window, operand 1, single buffered']
    #allocation6 [shape = 's32[1]{0}', space=sflag, size = 0x4, scoped, tag = 'scoped memory for tpu_custom_call.1']
    #allocation7 [shape = 'u8[65536]{0}', space=vmem, size = 0x10000, scoped, tag = 'input window, operand 2, single buffered']
    #allocation8 [shape = 'u8[65536]{0}', space=vmem, size = 0x10000, scoped, tag = 'input window, operand 3, single buffered']
    #allocation9 [shape = 's32[1]{0}', space=sflag, size = 0x4, scoped, tag = 'scoped memory for tpu_custom_call.1']
    #allocation10 [shape = 'u8[65536]{0}', space=vmem, size = 0x10000, scoped, tag = 'input window, operand 4, single buffered']
    #allocation11 [shape = 'u8[4096]{0}', space=vmem, size = 0x1000, scoped, tag = 'input window, operand 5, single buffered']
    #allocation12 [shape = 's32[1]{0}', space=sflag, size = 0x4, scoped, tag = 'scoped memory for tpu_custom_call.1']
    #allocation13 [shape = 'u8[4096]{0}', space=vmem, size = 0x1000, scoped, tag = 'output window, operand 0, single buffered']
    %11 = vsyncpa [#allocation3], 0
    %12 = vsyncpa [#allocation6], 0
    %13 = vsyncpa [#allocation9], 0
    %14 = vsyncpa [#allocation12], 0
    %15 = vsyncpa [#allocation4], 0
    // Predicated region
    $region2: #{tpu_custom_call.1} parent=1 // pred_check
      _
    $region3: #{tpu_custom_call.1} parent=1 // pred_check_branch
      %17 = sbr.rel (0) target = $region5
    $region4: #{tpu_custom_call.1} parent=1 // pred_region
      %19 = vsyncadd [#allocation3], 0
      %s21 = sshll.u32 %s0, 4
      %s22 = int_to_ptr.hbm [resolvable:$true] %s21
      %s23 = sshll.u32 [#allocation2], 4
      %s24 = int_to_ptr.vmem [resolvable:$true] %s23
      %26 = dma.hbm_to_vmem [thread:$0]  %s22, 128, %s24, [#allocation3]
    $region5: #{tpu_custom_call.1} parent=1 // pred_fallthru
      _
    // Predicated region
    $region6: #{tpu_custom_call.1} parent=1 // pred_check
      _
    $region7: #{tpu_custom_call.1} parent=1 // pred_check_branch
      %28 = sbr.rel (0) target = $region9
    $region8: #{tpu_custom_call.1} parent=1 // pred_region
      %30 = vsyncadd [#allocation6], 0
      %s31 = sshll.u32 %s1, 4
      %s32 = int_to_ptr.hbm [resolvable:$true] %s31
      %s33 = sshll.u32 [#allocation5], 4
      %s34 = int_to_ptr.vmem [resolvable:$true] %s33
      %39 = dma.hbm_to_vmem [thread:$0]  %s32, 2048, %s34, [#allocation6], 128, 128, 8
    $region9: #{tpu_custom_call.1} parent=1 // pred_fallthru
      _
    // Predicated region
    $region10: #{tpu_custom_call.1} parent=1 // pred_check
      _
    $region11: #{tpu_custom_call.1} parent=1 // pred_check_branch
      %41 = sbr.rel (0) target = $region13
    $region12: #{tpu_custom_call.1} parent=1 // pred_region
      %43 = vsyncadd [#allocation6], 0
      %s44 = sshll.u32 %s2, 4
      %s45 = int_to_ptr.hbm [resolvable:$true] %s44
      %s46 = sshll.u32 [#allocation7], 4
      %s47 = int_to_ptr.vmem [resolvable:$true] %s46
      %52 = dma.hbm_to_vmem [thread:$0]  %s45, 2048, %s47, [#allocation6], 128, 128, 8
    $region13: #{tpu_custom_call.1} parent=1 // pred_fallthru
      _
    // Predicated region
    $region14: #{tpu_custom_call.1} parent=1 // pred_check
      _
    $region15: #{tpu_custom_call.1} parent=1 // pred_check_branch
      %54 = sbr.rel (0) target = $region17
    $region16: #{tpu_custom_call.1} parent=1 // pred_region
      %56 = vsyncadd [#allocation9], 0
      %s57 = sshll.u32 %s3, 4
      %s58 = int_to_ptr.hbm [resolvable:$true] %s57
      %s59 = sshll.u32 [#allocation8], 4
      %s60 = int_to_ptr.vmem [resolvable:$true] %s59
      %65 = dma.hbm_to_vmem [thread:$0]  %s58, 2048, %s60, [#allocation9], 128, 128, 8
    $region17: #{tpu_custom_call.1} parent=1 // pred_fallthru
      _
    // Predicated region
    $region18: #{tpu_custom_call.1} parent=1 // pred_check
      _
    $region19: #{tpu_custom_call.1} parent=1 // pred_check_branch
      %67 = sbr.rel (0) target = $region21
    $region20: #{tpu_custom_call.1} parent=1 // pred_region
      %69 = vsyncadd [#allocation9], 0
      %s70 = sshll.u32 %s4, 4
      %s71 = int_to_ptr.hbm [resolvable:$true] %s70
      %s72 = sshll.u32 [#allocation10], 4
      %s73 = int_to_ptr.vmem [resolvable:$true] %s72
      %78 = dma.hbm_to_vmem [thread:$0]  %s71, 2048, %s73, [#allocation9], 128, 128, 8
    $region21: #{tpu_custom_call.1} parent=1 // pred_fallthru
      _
    // Predicated region
    $region22: #{tpu_custom_call.1} parent=1 // pred_check
      _
    $region23: #{tpu_custom_call.1} parent=1 // pred_check_branch
      %80 = sbr.rel (0) target = $region25
    $region24: #{tpu_custom_call.1} parent=1 // pred_region
      %82 = vsyncadd [#allocation12], 0
      %s84 = sshll.u32 %s5, 4
      %s85 = int_to_ptr.hbm [resolvable:$true] %s84
      %s86 = sshll.u32 [#allocation11], 4
      %s87 = int_to_ptr.vmem [resolvable:$true] %s86
      %89 = dma.hbm_to_vmem [thread:$0]  %s85, 128, %s87, [#allocation12]
    $region25: #{tpu_custom_call.1} parent=1 // pred_fallthru
      _
    // Predicated region
    $region26: #{tpu_custom_call.1} parent=1 // pred_check
      _
    $region27: #{tpu_custom_call.1} parent=1 // pred_check_branch
      %91 = sbr.rel (0) target = $region29
    $region28: #{tpu_custom_call.1} parent=1 // pred_region
      %93 = dma.done [#allocation3], 128
    $region29: #{tpu_custom_call.1} parent=1 // pred_fallthru
      _
    // Predicated region
    $region30: #{tpu_custom_call.1} parent=1 // pred_check
      _
    $region31: #{tpu_custom_call.1} parent=1 // pred_check_branch
      %95 = sbr.rel (0) target = $region33
    $region32: #{tpu_custom_call.1} parent=1 // pred_region
      %97 = dma.done [#allocation6], 2048
    $region33: #{tpu_custom_call.1} parent=1 // pred_fallthru
      _
    // Predicated region
    $region34: #{tpu_custom_call.1} parent=1 // pred_check
      _
    $region35: #{tpu_custom_call.1} parent=1 // pred_check_branch
      %99 = sbr.rel (0) target = $region37
    $region36: #{tpu_custom_call.1} parent=1 // pred_region
      %101 = dma.done [#allocation6], 2048
    $region37: #{tpu_custom_call.1} parent=1 // pred_fallthru
      _
    // Predicated region
    $region38: #{tpu_custom_call.1} parent=1 // pred_check
      _
    $region39: #{tpu_custom_call.1} parent=1 // pred_check_branch
      %103 = sbr.rel (0) target = $region41
    $region40: #{tpu_custom_call.1} parent=1 // pred_region
      %105 = dma.done [#allocation9], 2048
    $region41: #{tpu_custom_call.1} parent=1 // pred_fallthru
      _
    // Predicated region
    $region42: #{tpu_custom_call.1} parent=1 // pred_check
      _
    $region43: #{tpu_custom_call.1} parent=1 // pred_check_branch
      %107 = sbr.rel (0) target = $region45
    $region44: #{tpu_custom_call.1} parent=1 // pred_region
      %109 = dma.done [#allocation9], 2048
    $region45: #{tpu_custom_call.1} parent=1 // pred_fallthru
      _
    // Predicated region
    $region46: #{tpu_custom_call.1} parent=1 // pred_check
      _
    $region47: #{tpu_custom_call.1} parent=1 // pred_check_branch
      %111 = sbr.rel (0) target = $region49
    $region48: #{tpu_custom_call.1} parent=1 // pred_region
      %113 = dma.done [#allocation12], 128
    $region49: #{tpu_custom_call.1} parent=1 // pred_fallthru
      _
    %v114 = vld [vmem:[#allocation11] sm:$0x1]
    %v115 = vld [vmem:[#allocation11 + $0x1] sm:$0x1]
    %v116 = vld [vmem:[#allocation11 + $0x2] sm:$0x1]
    %v117 = vld [vmem:[#allocation11 + $0x3] sm:$0x1]
    %v118 = vld [vmem:[#allocation2] sm:$0xff]
    %v119 = vld [vmem:[#allocation5] sm:$0xff]
    %v120 = vld [vmem:[#allocation5 + $0x8] sm:$0xff]
    %v121 = vld [vmem:[#allocation5 + $0x10] sm:$0xff]
    %v122 = vld [vmem:[#allocation5 + $0x18] sm:$0xff]
    %v123 = vld [vmem:[#allocation5 + $0x20] sm:$0xff]
    %v124 = vld [vmem:[#allocation5 + $0x28] sm:$0xff]
    %v125 = vld [vmem:[#allocation5 + $0x30] sm:$0xff]
    %v126 = vld [vmem:[#allocation5 + $0x38] sm:$0xff]
    %v127 = vld [vmem:[#allocation5 + $0x40] sm:$0xff]
    %v128 = vld [vmem:[#allocation5 + $0x48] sm:$0xff]
    %v129 = vld [vmem:[#allocation5 + $0x50] sm:$0xff]
    %v130 = vld [vmem:[#allocation5 + $0x58] sm:$0xff]
    %v131 = vld [vmem:[#allocation5 + $0x60] sm:$0xff]
    %v132 = vld [vmem:[#allocation5 + $0x68] sm:$0xff]
    %v133 = vld [vmem:[#allocation5 + $0x70] sm:$0xff]
    %v134 = vld [vmem:[#allocation5 + $0x78] sm:$0xff]
    %v135 = vperm.slane %v114, 0
    %136 = vmatpush.msra.mxu0 %v134
    %137 = vmatpush.msra.mxu0 %v133
    %138 = vmatpush.msra.mxu0 %v132
    %139 = vmatpush.msra.mxu0 %v131
    %140 = vmatpush.msra.mxu0 %v130
    %141 = vmatpush.msra.mxu0 %v129
    %142 = vmatpush.msra.mxu0 %v128
    %143 = vmatpush.msra.mxu0 %v127
    %144 = vmatpush.msra.mxu0 %v126
    %145 = vmatpush.msra.mxu0 %v125
    %146 = vmatpush.msra.mxu0 %v124
    %147 = vmatpush.msra.mxu0 %v123
    %148 = vmatpush.msra.mxu0 %v122
    %149 = vmatpush.msra.mxu0 %v121
    %150 = vmatpush.msra.mxu0 %v120
    %151 = vmatpush.msra.mxu0 %v119
    %152 = vmatmul.f32.gmra.mxu0 %v118
    %v153 = vpop.f32.mrf.mxu0
    %v154 = vadd.f32 %v135, %v153
    %155 = vdwg.mxu0
    %v156 = vmax.f32 %v154, 0.0
    %v157 = vld [vmem:[#allocation7] sm:$0xff]
    %v158 = vld [vmem:[#allocation7 + $0x8] sm:$0xff]
    %v159 = vld [vmem:[#allocation7 + $0x10] sm:$0xff]
    %v160 = vld [vmem:[#allocation7 + $0x18] sm:$0xff]
    %v161 = vld [vmem:[#allocation7 + $0x20] sm:$0xff]
    %v162 = vld [vmem:[#allocation7 + $0x28] sm:$0xff]
    %v163 = vld [vmem:[#allocation7 + $0x30] sm:$0xff]
    %v164 = vld [vmem:[#allocation7 + $0x38] sm:$0xff]
    %v165 = vld [vmem:[#allocation7 + $0x40] sm:$0xff]
    %v166 = vld [vmem:[#allocation7 + $0x48] sm:$0xff]
    %v167 = vld [vmem:[#allocation7 + $0x50] sm:$0xff]
    %v168 = vld [vmem:[#allocation7 + $0x58] sm:$0xff]
    %v169 = vld [vmem:[#allocation7 + $0x60] sm:$0xff]
    %v170 = vld [vmem:[#allocation7 + $0x68] sm:$0xff]
    %v171 = vld [vmem:[#allocation7 + $0x70] sm:$0xff]
    %v172 = vld [vmem:[#allocation7 + $0x78] sm:$0xff]
    %v173 = vperm.slane %v115, 0
    %174 = vmatpush.msra.mxu0 %v172
    %175 = vmatpush.msra.mxu0 %v171
    %176 = vmatpush.msra.mxu0 %v170
    %177 = vmatpush.msra.mxu0 %v169
    %178 = vmatpush.msra.mxu0 %v168
    %179 = vmatpush.msra.mxu0 %v167
    %180 = vmatpush.msra.mxu0 %v166
    %181 = vmatpush.msra.mxu0 %v165
    %182 = vmatpush.msra.mxu0 %v164
    %183 = vmatpush.msra.mxu0 %v163
    %184 = vmatpush.msra.mxu0 %v162
    %185 = vmatpush.msra.mxu0 %v161
    %186 = vmatpush.msra.mxu0 %v160
    %187 = vmatpush.msra.mxu0 %v159
    %188 = vmatpush.msra.mxu0 %v158
    %189 = vmatpush.msra.mxu0 %v157
    %190 = vmatmul.f32.gmra.mxu0 %v156
    %v191 = vpop.f32.mrf.mxu0
    %v192 = vadd.f32 %v173, %v191
    %193 = vdwg.mxu0
    %v194 = vmax.f32 %v192, 0.0
    %v195 = vld [vmem:[#allocation8] sm:$0xff]
    %v196 = vld [vmem:[#allocation8 + $0x8] sm:$0xff]
    %v197 = vld [vmem:[#allocation8 + $0x10] sm:$0xff]
    %v198 = vld [vmem:[#allocation8 + $0x18] sm:$0xff]
    %v199 = vld [vmem:[#allocation8 + $0x20] sm:$0xff]
    %v200 = vld [vmem:[#allocation8 + $0x28] sm:$0xff]
    %v201 = vld [vmem:[#allocation8 + $0x30] sm:$0xff]
    %v202 = vld [vmem:[#allocation8 + $0x38] sm:$0xff]
    %v203 = vld [vmem:[#allocation8 + $0x40] sm:$0xff]
    %v204 = vld [vmem:[#allocation8 + $0x48] sm:$0xff]
    %v205 = vld [vmem:[#allocation8 + $0x50] sm:$0xff]
    %v206 = vld [vmem:[#allocation8 + $0x58] sm:$0xff]
    %v207 = vld [vmem:[#allocation8 + $0x60] sm:$0xff]
    %v208 = vld [vmem:[#allocation8 + $0x68] sm:$0xff]
    %v209 = vld [vmem:[#allocation8 + $0x70] sm:$0xff]
    %v210 = vld [vmem:[#allocation8 + $0x78] sm:$0xff]
    %v211 = vperm.slane %v116, 0
    %212 = vmatpush.msra.mxu0 %v210
    %213 = vmatpush.msra.mxu0 %v209
    %214 = vmatpush.msra.mxu0 %v208
    %215 = vmatpush.msra.mxu0 %v207
    %216 = vmatpush.msra.mxu0 %v206
    %217 = vmatpush.msra.mxu0 %v205
    %218 = vmatpush.msra.mxu0 %v204
    %219 = vmatpush.msra.mxu0 %v203
    %220 = vmatpush.msra.mxu0 %v202
    %221 = vmatpush.msra.mxu0 %v201
    %222 = vmatpush.msra.mxu0 %v200
    %223 = vmatpush.msra.mxu0 %v199
    %224 = vmatpush.msra.mxu0 %v198
    %225 = vmatpush.msra.mxu0 %v197
    %226 = vmatpush.msra.mxu0 %v196
    %227 = vmatpush.msra.mxu0 %v195
    %228 = vmatmul.f32.gmra.mxu0 %v194
    %v229 = vpop.f32.mrf.mxu0
    %v230 = vadd.f32 %v211, %v229
    %231 = vdwg.mxu0
    %v232 = vmax.f32 %v230, 0.0
    %v233 = vld [vmem:[#allocation10] sm:$0xff]
    %v234 = vld [vmem:[#allocation10 + $0x8] sm:$0xff]
    %v235 = vld [vmem:[#allocation10 + $0x10] sm:$0xff]
    %v236 = vld [vmem:[#allocation10 + $0x18] sm:$0xff]
    %v237 = vld [vmem:[#allocation10 + $0x20] sm:$0xff]
    %v238 = vld [vmem:[#allocation10 + $0x28] sm:$0xff]
    %v239 = vld [vmem:[#allocation10 + $0x30] sm:$0xff]
    %v240 = vld [vmem:[#allocation10 + $0x38] sm:$0xff]
    %v241 = vld [vmem:[#allocation10 + $0x40] sm:$0xff]
    %v242 = vld [vmem:[#allocation10 + $0x48] sm:$0xff]
    %v243 = vld [vmem:[#allocation10 + $0x50] sm:$0xff]
    %v244 = vld [vmem:[#allocation10 + $0x58] sm:$0xff]
    %v245 = vld [vmem:[#allocation10 + $0x60] sm:$0xff]
    %v246 = vld [vmem:[#allocation10 + $0x68] sm:$0xff]
    %v247 = vld [vmem:[#allocation10 + $0x70] sm:$0xff]
    %v248 = vld [vmem:[#allocation10 + $0x78] sm:$0xff]
    %v249 = vperm.slane %v117, 0
    %250 = vmatpush.msra.mxu0 %v248
    %251 = vmatpush.msra.mxu0 %v247
    %252 = vmatpush.msra.mxu0 %v246
    %253 = vmatpush.msra.mxu0 %v245
    %254 = vmatpush.msra.mxu0 %v244
    %255 = vmatpush.msra.mxu0 %v243
    %256 = vmatpush.msra.mxu0 %v242
    %257 = vmatpush.msra.mxu0 %v241
    %258 = vmatpush.msra.mxu0 %v240
    %259 = vmatpush.msra.mxu0 %v239
    %260 = vmatpush.msra.mxu0 %v238
    %261 = vmatpush.msra.mxu0 %v237
    %262 = vmatpush.msra.mxu0 %v236
    %263 = vmatpush.msra.mxu0 %v235
    %264 = vmatpush.msra.mxu0 %v234
    %265 = vmatpush.msra.mxu0 %v233
    %266 = vmatmul.f32.gmra.mxu0 %v232
    %v267 = vpop.f32.mrf.mxu0
    %v268 = vadd.f32 %v249, %v267
    %269 = vdwg.mxu0
    %270 = vst [vmem:[#allocation13] sm:$0xff] %v268
    // Predicated region
    $region50: #{tpu_custom_call.1} parent=1 // pred_check
      _
    $region51: #{tpu_custom_call.1} parent=1 // pred_check_branch
      %272 = sbr.rel (0) target = $region53
    $region52: #{tpu_custom_call.1} parent=1 // pred_region
      %274 = vsyncadd [#allocation4], 0
      %s276 = sshll.u32 [#allocation13], 4
      %s277 = int_to_ptr.vmem [resolvable:$true] %s276
      %s278 = sshll.u32 %s6, 4
      %s279 = int_to_ptr.hbm [resolvable:$true] %s278
      %281 = dma.vmem_to_hbm [thread:$0]  %s277, 128, %s279, [#allocation4]
    $region53: #{tpu_custom_call.1} parent=1 // pred_fallthru
      _
    // Predicated region
    $region54: #{tpu_custom_call.1} parent=1 // pred_check
      _
    $region55: #{tpu_custom_call.1} parent=1 // pred_check_branch
      %283 = sbr.rel (0) target = $region57
    $region56: #{tpu_custom_call.1} parent=1 // pred_region
      %285 = dma.done [#allocation4], 128
    $region57: #{tpu_custom_call.1} parent=1 // pred_fallthru
      _
    %286 = vsyncpa [#allocation3], 1
    %287 = vsyncpa [#allocation6], 1
    %288 = vsyncpa [#allocation9], 1
    %289 = vsyncpa [#allocation12], 1
    %290 = vsyncpa [#allocation4], 1

</llo_original>
